<compile_context>
chip_gen: v5e
topology: v5e:2x2
jax: 0.10.0
libtpu: 0.0.40
codegen_flags: <defaults>
</compile_context>

<pallas_src>
import jax
import jax.numpy as jnp
from jax.experimental import pallas as pl
from jax.experimental.pallas import tpu as pltpu


def se_conv_kernel(xse_ref, w1t_ref, b1_ref, x_ref, w2t_ref, o_ref):
    """One (batch, C_out-tile, K-tile) grid step.

    xse_ref : (1, 1, C_se)      bf16   squeeze-excite input (per batch)
    w1t_ref : (n_k, C_se, tk)   bf16   conv1 weight, pre-tiled along C_mid (resident)
    b1_ref  : (n_k, 1, tk)      f32    conv1 bias, pre-tiled along C_mid (resident)
    x_ref   : (1, HW, tk)       bf16   main activations, channels-last K tile
    w2t_ref : (tk, tn)          bf16   conv2 weight (transposed) tile
    o_ref   : (1, HW, tn)       f32    output tile (resident accumulator over K)
    """
    k = pl.program_id(2)

    @pl.when(k == 0)
    def _init():
        o_ref[...] = jnp.zeros_like(o_ref)

    # SE gate slice for this K tile: sigmoid(xse @ W1^T + b1), shape (1, tk).
    s = jnp.dot(xse_ref[0], w1t_ref[k],
                preferred_element_type=jnp.float32) + b1_ref[k]        # (1, tk) f32
    gate = jax.nn.sigmoid(s).astype(x_ref.dtype)                       # (1, tk) bf16

    # Broadcast-multiply over the HW sublanes, then 1x1 conv #2 as a matmul (MXU).
    xm = x_ref[0] * gate                                               # (HW, tk) bf16
    o_ref[0] += jnp.dot(xm, w2t_ref[...],
                        preferred_element_type=jnp.float32)            # (HW, tn) f32


def _pick_tile(dim, target, align=128):
    """Largest multiple of `align` that divides `dim` and is <= target, else `dim`."""
    if dim <= target:
        return dim
    t = (target // align) * align
    while t >= align:
        if dim % t == 0:
            return t
        t -= align
    return dim


def se_conv_block(xse, w1t, b1r, x, w2t, *, tn, tk):
    """xse: (B,1,C_se) bf16; w1t: (n_k,C_se,tk) bf16; b1r: (n_k,1,tk) f32;
    x: (B,HW,C_mid) bf16; w2t: (C_mid,C_out) bf16.  Returns (B,HW,C_out) f32."""
    B, HW, C_mid = x.shape
    C_se = xse.shape[-1]
    C_out = w2t.shape[1]
    n_k = C_mid // tk
    n_j = C_out // tn
    return pl.pallas_call(
        se_conv_kernel,
        out_shape=jax.ShapeDtypeStruct((B, HW, C_out), jnp.float32),
        grid=(B, n_j, n_k),
        in_specs=[
            pl.BlockSpec((1, 1, C_se), lambda b, j, k: (b, 0, 0)),      # xse
            pl.BlockSpec((n_k, C_se, tk), lambda b, j, k: (0, 0, 0)),   # w1t (resident)
            pl.BlockSpec((n_k, 1, tk), lambda b, j, k: (0, 0, 0)),      # b1  (resident)
            pl.BlockSpec((1, HW, tk), lambda b, j, k: (b, 0, k)),       # x
            pl.BlockSpec((tk, tn), lambda b, j, k: (k, j)),             # w2t
        ],
        out_specs=pl.BlockSpec((1, HW, tn), lambda b, j, k: (b, 0, j)),
        compiler_params=pltpu.CompilerParams(
            dimension_semantics=("parallel", "parallel", "arbitrary")),
    )(xse, w1t, b1r, x, w2t)


def module_forward(x834, x831, w1, b1, w2, *, tn_target=640, tk_target=1920):
    """Mirrors M.forward.  x834: (B, C_se, 1, 1); x831: (B, C_mid, H, W) (NCHW, f32).
    w1: (C_mid, C_se); b1: (C_mid,); w2: (C_out, C_mid).  Returns (B, C_out, H, W) f32."""
    B, C_se = x834.shape[:2]
    _, C_mid, H, W = x831.shape
    C_out = w2.shape[0]
    HW = H * W

    tk = _pick_tile(C_mid, tk_target)   # K (C_mid) reduction tile
    tn = _pick_tile(C_out, tn_target)   # C_out parallel tile (default: full width, lane-dense)
    n_k = C_mid // tk

    # Channels-last activations; bf16 for HBM / MXU efficiency (f32 accumulation).
    x = x831.reshape(B, C_mid, HW).transpose(0, 2, 1).astype(jnp.bfloat16)   # (B, HW, C_mid)
    xse = x834.reshape(B, 1, C_se).astype(jnp.bfloat16)                      # (B, 1, C_se)

    # 1x1 convs become matmuls; pre-transpose / pre-tile weights (one-time prep).
    w1t = (w1.astype(jnp.bfloat16).T                                         # (C_se, C_mid)
           .reshape(C_se, n_k, tk).transpose(1, 0, 2))                       # (n_k, C_se, tk)
    b1r = b1.astype(jnp.float32).reshape(n_k, 1, tk)                         # (n_k, 1, tk)
    w2t = w2.astype(jnp.bfloat16).T                                          # (C_mid, C_out)

    out = se_conv_block(xse, w1t, b1r, x, w2t, tn=tn, tk=tk)                 # (B, HW, C_out) f32
    return out.transpose(0, 2, 1).reshape(B, C_out, H, W)


def reference(x834, x831, w1, b1, w2):
    """Pure f32 reference matching the PyTorch module."""
    B, C_se = x834.shape[:2]
    xse = x834.reshape(B, C_se)
    s = jax.nn.sigmoid(jnp.einsum('oc,bc->bo', w1, xse) + b1[None, :])   # (B, C_mid)
    xm = x831 * s[:, :, None, None]
    return jnp.einsum('oc,bchw->bohw', w2, xm)


if __name__ == "__main__":
    # Small shapes consistent with the module structure
    # (real module: C_se=160, C_mid=3840, C_out=640, H=W=7, B=1).
    B, C_se, C_mid, C_out, H, W = 2, 32, 256, 256, 8, 8

    key = jax.random.PRNGKey(0)
    k1, k2, k3, k4, k5 = jax.random.split(key, 5)

    w1 = jax.random.normal(k1, (C_mid, C_se), jnp.float32) * 0.05   # conv2d265 weight (1x1)
    b1 = jax.random.normal(k2, (C_mid,), jnp.float32) * 0.05        # conv2d265 bias
    w2 = jax.random.normal(k3, (C_out, C_mid), jnp.float32) * 0.05  # conv2d266 weight (1x1, no bias)

    x834 = jax.random.normal(k4, (B, C_se, 1, 1), jnp.float32)
    x831 = jax.random.normal(k5, (B, C_mid, H, W), jnp.float32)

    ref = reference(x834, x831, w1, b1, w2)

    # 1) Small tile targets so the test exercises multi-tile C_out (j) and C_mid (k) axes.
    out_small = jax.block_until_ready(
        module_forward(x834, x831, w1, b1, w2, tn_target=128, tk_target=128))
    assert out_small.shape == (B, C_out, H, W)
    # bf16 inputs / f32 accumulation vs pure-f32 reference -> bf16-level tolerance.
    assert jnp.allclose(out_small, ref, rtol=2e-2, atol=2e-2), "mismatch (small tiles)"

    # 2) Default (large / single-tile) path, matching what the real shapes would use.
    out_big = jax.block_until_ready(module_forward(x834, x831, w1, b1, w2))
    assert out_big.shape == (B, C_out, H, W)
    assert jnp.allclose(out_big, ref, rtol=2e-2, atol=2e-2), "mismatch (default tiles)"

    print("KERNEL_OK")
</pallas_src>

<mosaic_0001>
module attributes {stable_mosaic.version = 11 : i64} {
  func.func @se_conv_kernel(%arg0: i32, %arg1: i32, %arg2: i32, %arg3: memref<1x1x32xbf16, #tpu.memory_space<vmem>>, %arg4: memref<2x32x128xbf16, #tpu.memory_space<vmem>>, %arg5: memref<2x1x128xf32, #tpu.memory_space<vmem>>, %arg6: memref<1x64x128xbf16, #tpu.memory_space<vmem>>, %arg7: memref<128x128xbf16, #tpu.memory_space<vmem>>, %arg8: memref<1x64x128xf32, #tpu.memory_space<vmem>>) attributes {dimension_semantics = [#tpu.dimension_semantics<parallel>, #tpu.dimension_semantics<parallel>, #tpu.dimension_semantics<arbitrary>], iteration_bounds = array<i64: 2, 2, 2>, scalar_prefetch = 0 : i64, scratch_operands = 0 : i64, tpu.core_type = #tpu.core_type<tc>, window_params = [{transform_indices = @transform_0, window_bounds = array<i64: 1, 1, 32>}, {pipeline_mode = #tpu.pipeline_mode<synchronous>, transform_indices = @transform_1, window_bounds = array<i64: 2, 32, 128>}, {pipeline_mode = #tpu.pipeline_mode<synchronous>, transform_indices = @transform_2, window_bounds = array<i64: 2, 1, 128>}, {transform_indices = @transform_3, window_bounds = array<i64: 1, 64, 128>}, {transform_indices = @transform_4, window_bounds = array<i64: 128, 128>}, {transform_indices = @transform_5, window_bounds = array<i64: 1, 64, 128>}]} {
    %c0_i32 = arith.constant 0 : i32
    %0 = arith.cmpi eq, %arg2, %c0_i32 : i32
    %1 = arith.extui %0 : i1 to i32
    %c0_i32_0 = arith.constant 0 : i32
    %2 = arith.cmpi ne, %1, %c0_i32_0 : i32
    scf.if %2 {
      %cst_20 = arith.constant 0.000000e+00 : f32
      %31 = vector.broadcast %cst_20 : f32 to vector<1x64x128xf32>
      %c0_21 = arith.constant 0 : index
      %c0_22 = arith.constant 0 : index
      %c0_23 = arith.constant 0 : index
      %32 = vector.load %arg8[%c0_21, %c0_22, %c0_23] : memref<1x64x128xf32, #tpu.memory_space<vmem>>, vector<1x64x128xf32>
      tpu.vector_store %arg8[%c0_21, %c0_22, %c0_23], %31 {strides = array<i32>} : memref<1x64x128xf32, #tpu.memory_space<vmem>>, vector<1x64x128xf32>,
    } else {
    }
    %c0 = arith.constant 0 : index
    %c0_1 = arith.constant 0 : index
    %c0_2 = arith.constant 0 : index
    %3 = vector.load %arg3[%c0, %c0_1, %c0_2] : memref<1x1x32xbf16, #tpu.memory_space<vmem>>, vector<1x1x32xbf16>
    %4 = vector.shape_cast %3 : vector<1x1x32xbf16> to vector<1x32xbf16>
    %5 = arith.index_cast %arg2 : i32 to index
    %c0_3 = arith.constant 0 : index
    %c0_4 = arith.constant 0 : index
    %6 = vector.load %arg4[%5, %c0_3, %c0_4] : memref<2x32x128xbf16, #tpu.memory_space<vmem>>, vector<1x32x128xbf16>
    %7 = vector.shape_cast %6 : vector<1x32x128xbf16> to vector<32x128xbf16>
    %cst = arith.constant dense<0.000000e+00> : vector<1x128xf32>
    %8 = tpu.matmul %4, %7, %cst {dimension_numbers = #tpu.dot_dimension_numbers<[1], [0], [0], [1], [0, 0, 1, 1], [], []>} : vector<1x32xbf16>, vector<32x128xbf16>, vector<1x128xf32> -> vector<1x128xf32>
    %9 = arith.index_cast %arg2 : i32 to index
    %c0_5 = arith.constant 0 : index
    %c0_6 = arith.constant 0 : index
    %10 = vector.load %arg5[%9, %c0_5, %c0_6] : memref<2x1x128xf32, #tpu.memory_space<vmem>>, vector<1x1x128xf32>
    %11 = vector.shape_cast %10 : vector<1x1x128xf32> to vector<1x128xf32>
    %12 = arith.addf %8, %11 : vector<1x128xf32>
    %13 = arith.negf %12 : vector<1x128xf32>
    %14 = math.exp %13 : vector<1x128xf32>
    %cst_7 = arith.constant 1.000000e+00 : f32
    %15 = vector.broadcast %cst_7 : f32 to vector<1x128xf32>
    %16 = arith.addf %15, %14 : vector<1x128xf32>
    %17 = arith.divf %15, %16 : vector<1x128xf32>
    %18 = arith.truncf %17 : vector<1x128xf32> to vector<1x128xbf16>
    %c0_8 = arith.constant 0 : index
    %c0_9 = arith.constant 0 : index
    %c0_10 = arith.constant 0 : index
    %19 = vector.load %arg6[%c0_8, %c0_9, %c0_10] : memref<1x64x128xbf16, #tpu.memory_space<vmem>>, vector<1x64x128xbf16>
    %20 = vector.shape_cast %19 : vector<1x64x128xbf16> to vector<64x128xbf16>
    %21 = vector.broadcast %18 : vector<1x128xbf16> to vector<64x128xbf16>
    %22 = arith.mulf %20, %21 : vector<64x128xbf16>
    %c0_11 = arith.constant 0 : index
    %c0_12 = arith.constant 0 : index
    %c0_13 = arith.constant 0 : index
    %23 = vector.load %arg8[%c0_11, %c0_12, %c0_13] : memref<1x64x128xf32, #tpu.memory_space<vmem>>, vector<1x64x128xf32>
    %24 = vector.shape_cast %23 : vector<1x64x128xf32> to vector<64x128xf32>
    %c0_14 = arith.constant 0 : index
    %c0_15 = arith.constant 0 : index
    %25 = vector.load %arg7[%c0_14, %c0_15] : memref<128x128xbf16, #tpu.memory_space<vmem>>, vector<128x128xbf16>
    %cst_16 = arith.constant dense<0.000000e+00> : vector<64x128xf32>
    %26 = tpu.matmul %22, %25, %cst_16 {dimension_numbers = #tpu.dot_dimension_numbers<[1], [0], [0], [1], [0, 0, 1, 1], [], []>} : vector<64x128xbf16>, vector<128x128xbf16>, vector<64x128xf32> -> vector<64x128xf32>
    %27 = arith.addf %24, %26 : vector<64x128xf32>
    %c0_17 = arith.constant 0 : index
    %c0_18 = arith.constant 0 : index
    %c0_19 = arith.constant 0 : index
    %28 = vector.load %arg8[%c0_17, %c0_18, %c0_19] : memref<1x64x128xf32, #tpu.memory_space<vmem>>, vector<1x64x128xf32>
    %29 = vector.shape_cast %28 : vector<1x64x128xf32> to vector<64x128xf32>
    %30 = vector.shape_cast %27 : vector<64x128xf32> to vector<1x64x128xf32>
    tpu.vector_store %arg8[%c0_17, %c0_18, %c0_19], %30 {strides = array<i32>} : memref<1x64x128xf32, #tpu.memory_space<vmem>>, vector<1x64x128xf32>,
    return
  }
  func.func @transform_0(%arg0: i32, %arg1: i32, %arg2: i32) -> (i32, i32, i32) {
    %c0_i32 = arith.constant 0 : i32
    %c0_i32_0 = arith.constant 0 : i32
    %c0_i32_1 = arith.constant 0 : i32
    return %arg0, %c0_i32, %c0_i32_0 : i32, i32, i32
  }
  func.func @transform_1(%arg0: i32, %arg1: i32, %arg2: i32) -> (i32, i32, i32) {
    %c0_i32 = arith.constant 0 : i32
    %c0_i32_0 = arith.constant 0 : i32
    %c0_i32_1 = arith.constant 0 : i32
    %c0_i32_2 = arith.constant 0 : i32
    return %c0_i32, %c0_i32_0, %c0_i32_1 : i32, i32, i32
  }
  func.func @transform_2(%arg0: i32, %arg1: i32, %arg2: i32) -> (i32, i32, i32) {
    %c0_i32 = arith.constant 0 : i32
    %c0_i32_0 = arith.constant 0 : i32
    %c0_i32_1 = arith.constant 0 : i32
    %c0_i32_2 = arith.constant 0 : i32
    return %c0_i32, %c0_i32_0, %c0_i32_1 : i32, i32, i32
  }
  func.func @transform_3(%arg0: i32, %arg1: i32, %arg2: i32) -> (i32, i32, i32) {
    %c0_i32 = arith.constant 0 : i32
    %c0_i32_0 = arith.constant 0 : i32
    return %arg0, %c0_i32, %arg2 : i32, i32, i32
  }
  func.func @transform_4(%arg0: i32, %arg1: i32, %arg2: i32) -> (i32, i32) {
    %c0_i32 = arith.constant 0 : i32
    return %arg2, %arg1 : i32, i32
  }
  func.func @transform_5(%arg0: i32, %arg1: i32, %arg2: i32) -> (i32, i32, i32) {
    %c0_i32 = arith.constant 0 : i32
    %c0_i32_0 = arith.constant 0 : i32
    return %arg0, %c0_i32, %arg1 : i32, i32, i32
  }
}

</mosaic_0001>

<llo_original>
// kernel: tpu_custom_call.1
$region0: #{tpu_custom_call.1}
  #allocation0 [shape = 'u32[]', space=smem, size = 0x4, offset = 0x4, fixed_abs, tag = 'smem constant byte address 0x4 - core index']
  #allocation1 [shape = 'u32[72,128]{1,0:T(1,128)}', space=vmem, size = 0x9000, scoped, tag = 'internal scratch']
  %s0 = inlined_call_operand.vmem [shape: bf16[2,1,32], index: 0, kind: input, shape index: {}]
  %s1 = inlined_call_operand.hbm [shape: bf16[2,32,128], index: 1, kind: input, shape index: {}]
  %s2 = inlined_call_operand.vmem [shape: f32[2,1,128], index: 2, kind: input, shape index: {}]
  %s3 = inlined_call_operand.hbm [shape: bf16[2,64,256], index: 3, kind: input, shape index: {}]
  %s4 = inlined_call_operand.hbm [shape: bf16[256,256], index: 4, kind: input, shape index: {}]
  %s5 = inlined_call_operand.hbm [shape: f32[2,64,256], index: 5, kind: output, shape index: {}]
  %s6 = sld [smem:[#allocation0]]
  $region69: #{tpu_custom_call.1} parent=0
    _
  %s8 = ssub.s32 1, %s6
  %s9 = scalar_select 0, %s8, %s6
  $region1: #{tpu_custom_call.1} parent=0
    #allocation2 [shape = 'u8[16384]{0}', space=vmem, size = 0x4000, scoped, tag = 'input window, operand 1, single buffered']
    #allocation3 [shape = 's32[2]{0}', space=sflag, size = 0x8, scoped, tag = 'scoped memory for tpu_custom_call.1']
    #allocation4 [shape = 's32[2]{0}', space=sflag, size = 0x8, scoped, tag = 'scoped memory for tpu_custom_call.1']
    #allocation5 [shape = 'u8[32768]{0}', space=vmem, size = 0x8000, scoped, tag = 'input window, operand 3']
    #allocation6 [shape = 's32[2]{0}', space=sflag, size = 0x8, scoped, tag = 'scoped memory for tpu_custom_call.1']
    #allocation7 [shape = 'u8[65536]{0}', space=vmem, size = 0x10000, scoped, tag = 'input window, operand 4']
    #allocation8 [shape = 'u8[65536]{0}', space=vmem, size = 0x10000, scoped, tag = 'output window, operand 0']
    %10 = vsyncpa [#allocation3], 0
    %11 = vsyncpa [#allocation6], 0
    %s12 = scalar_lea.sflag [#allocation6], 1
    %13 = vsyncpa %s12, 0
    %14 = vsyncpa [#allocation4], 0
    %s15 = scalar_lea.sflag [#allocation4], 1
    %16 = vsyncpa %s15, 0
    loop: start=0, step=1, limit=10
    $region2: #{tpu_custom_call.1} parent=1 // loop_pre_header
      _
    $region3: #{tpu_custom_call.1} parent=1 // loop_header
      %s18 = sphi 0, %s22
      %p19 = scmp.ge.s32.totalorder %s18, 10
      %s25 = sphi 0, %s44
      %s26 = sphi 0, %s40
      %s27 = sphi 0, %s36
      %s28 = sphi 0, %s25
      %s29 = sphi 0, %s26
      %s30 = sphi 0, %s27
      %s31 = sphi 0, %s28
      %s32 = sphi 0, %s29
      %s33 = sphi 0, %s30
      %s47 = sphi 0, %s49
      %s50 = sphi 0, %s47
      %s51 = sphi 0, %s50
      %s67 = sphi 0, %s51
      %s71 = sphi 0, %s71
      %s73 = sphi 0, %s71
      %s74 = sphi 0, %s73
      %s88 = sphi 0, %s74
      %s92 = sphi 0, %s92
      %s94 = sphi 0, %s92
      %s95 = sphi 0, %s94
      %s109 = sphi 0, %s95
      %s117 = sphi 0, %s119
      %s120 = sphi 0, %s117
      %s121 = sphi 0, %s120
      %s137 = sphi 0, %s121
      %s145 = sphi 0, %s147
      %s148 = sphi 0, %s145
      %s149 = sphi 0, %s148
      %s165 = sphi 0, %s149
      %s173 = sphi 0, %s175
      %s176 = sphi 0, %s173
      %s177 = sphi 0, %s176
      %s193 = sphi 0, %s177
    $region4: #{tpu_custom_call.1} parent=1 // loop_header_branch
      %21 = sbr.rel (%p19) target = $region8
    $region5: #{tpu_custom_call.1} parent=1 // loop_body
      %s23 = ssub.s32 %s18, 1
      %s24 = ssub.s32 %s18, 2
      %s34 = sadd.s32 1, %s27
      %p35 = scmp.ge.s32.totalorder %s34, 2
      %s36 = scalar_select %p35, 0, %s34
      %s37 = sadd.s32 1, %s26
      %s38 = scalar_select %p35, %s37, %s26
      %p39 = scmp.ge.s32.totalorder %s38, 2
      %s40 = scalar_select %p39, 0, %s38
      %s41 = sadd.s32 1, %s25
      %s42 = scalar_select %p39, %s41, %s25
      %p43 = scmp.ge.s32.totalorder %s42, 2
      %s44 = scalar_select %p43, 0, %s42
      %s45 = ssub.s32 %s25, %s44
      %p46 = scmp.eq.s32.totalorder %s45, 0
      %s48 = sadd.s32 %s47, 1
      %s49 = scalar_select %p46, %s47, %s48
      %p52 = pneg %p46
      %p53 = scmp.eq.s32.totalorder %s18, 7
      %p54 = por %p52, %p53
      %p55 = scmp.ne.s32.totalorder %s47, %s50
      %p56 = scmp.eq.s32.totalorder %s18, 0
      %p57 = por %p55, %p56
      %p58 = scmp.ne.s32.totalorder %s47, %s50
      %p59 = scmp.eq.s32.totalorder %s23, 7
      %p60 = por %p58, %p59
      %p61 = scmp.ne.s32.totalorder %s50, %s51
      %p62 = scmp.eq.s32.totalorder %s23, 0
      %p63 = por %p61, %p62
      %p64 = scmp.ne.s32.totalorder %s50, %s51
      %p65 = scmp.eq.s32.totalorder %s24, 7
      %p66 = por %p64, %p65
      %p68 = scmp.ne.s32.totalorder %s51, %s67
      %p69 = scmp.eq.s32.totalorder %s24, 0
      %p70 = por %p68, %p69
      %s72 = sadd.s32 %s71, 1
      %p75 = scmp.eq.s32.totalorder %s18, 7
      %p76 = scmp.ne.s32.totalorder %s71, %s73
      %p77 = scmp.eq.s32.totalorder %s18, 0
      %p78 = por %p76, %p77
      %p79 = scmp.ne.s32.totalorder %s71, %s73
      %p80 = scmp.eq.s32.totalorder %s23, 7
      %p81 = por %p79, %p80
      %p82 = scmp.ne.s32.totalorder %s73, %s74
      %p83 = scmp.eq.s32.totalorder %s23, 0
      %p84 = por %p82, %p83
      %p85 = scmp.ne.s32.totalorder %s73, %s74
      %p86 = scmp.eq.s32.totalorder %s24, 7
      %p87 = por %p85, %p86
      %p89 = scmp.ne.s32.totalorder %s74, %s88
      %p90 = scmp.eq.s32.totalorder %s24, 0
      %p91 = por %p89, %p90
      %s93 = sadd.s32 %s92, 1
      %p96 = scmp.eq.s32.totalorder %s18, 7
      %p97 = scmp.ne.s32.totalorder %s92, %s94
      %p98 = scmp.eq.s32.totalorder %s18, 0
      %p99 = por %p97, %p98
      %p100 = scmp.ne.s32.totalorder %s92, %s94
      %p101 = scmp.eq.s32.totalorder %s23, 7
      %p102 = por %p100, %p101
      %p103 = scmp.ne.s32.totalorder %s94, %s95
      %p104 = scmp.eq.s32.totalorder %s23, 0
      %p105 = por %p103, %p104
      %p106 = scmp.ne.s32.totalorder %s94, %s95
      %p107 = scmp.eq.s32.totalorder %s24, 7
      %p108 = por %p106, %p107
      %p110 = scmp.ne.s32.totalorder %s95, %s109
      %p111 = scmp.eq.s32.totalorder %s24, 0
      %p112 = por %p110, %p111
      %s113 = ssub.s32 %s25, %s44
      %s114 = ssub.s32 %s27, %s36
      %s115 = sor.u32 %s113, %s114
      %p116 = scmp.eq.s32.totalorder %s115, 0
      %s118 = sadd.s32 %s117, 1
      %s119 = scalar_select %p116, %s117, %s118
      %p122 = pneg %p116
      %p123 = scmp.eq.s32.totalorder %s18, 7
      %p124 = por %p122, %p123
      %p125 = scmp.ne.s32.totalorder %s117, %s120
      %p126 = scmp.eq.s32.totalorder %s18, 0
      %p127 = por %p125, %p126
      %p128 = scmp.ne.s32.totalorder %s117, %s120
      %p129 = scmp.eq.s32.totalorder %s23, 7
      %p130 = por %p128, %p129
      %p131 = scmp.ne.s32.totalorder %s120, %s121
      %p132 = scmp.eq.s32.totalorder %s23, 0
      %p133 = por %p131, %p132
      %p134 = scmp.ne.s32.totalorder %s120, %s121
      %p135 = scmp.eq.s32.totalorder %s24, 7
      %p136 = por %p134, %p135
      %p138 = scmp.ne.s32.totalorder %s121, %s137
      %p139 = scmp.eq.s32.totalorder %s24, 0
      %p140 = por %p138, %p139
      %s141 = ssub.s32 %s27, %s36
      %s142 = ssub.s32 %s26, %s40
      %s143 = sor.u32 %s141, %s142
      %p144 = scmp.eq.s32.totalorder %s143, 0
      %s146 = sadd.s32 %s145, 1
      %s147 = scalar_select %p144, %s145, %s146
      %p150 = pneg %p144
      %p151 = scmp.eq.s32.totalorder %s18, 7
      %p152 = por %p150, %p151
      %p153 = scmp.ne.s32.totalorder %s145, %s148
      %p154 = scmp.eq.s32.totalorder %s18, 0
      %p155 = por %p153, %p154
      %p156 = scmp.ne.s32.totalorder %s145, %s148
      %p157 = scmp.eq.s32.totalorder %s23, 7
      %p158 = por %p156, %p157
      %p159 = scmp.ne.s32.totalorder %s148, %s149
      %p160 = scmp.eq.s32.totalorder %s23, 0
      %p161 = por %p159, %p160
      %p162 = scmp.ne.s32.totalorder %s148, %s149
      %p163 = scmp.eq.s32.totalorder %s24, 7
      %p164 = por %p162, %p163
      %p166 = scmp.ne.s32.totalorder %s149, %s165
      %p167 = scmp.eq.s32.totalorder %s24, 0
      %p168 = por %p166, %p167
      %s169 = ssub.s32 %s25, %s44
      %s170 = ssub.s32 %s26, %s40
      %s171 = sor.u32 %s169, %s170
      %p172 = scmp.eq.s32.totalorder %s171, 0
      %s174 = sadd.s32 %s173, 1
      %s175 = scalar_select %p172, %s173, %s174
      %p178 = pneg %p172
      %p179 = scmp.eq.s32.totalorder %s18, 7
      %p180 = por %p178, %p179
      %p181 = scmp.ne.s32.totalorder %s173, %s176
      %p182 = scmp.eq.s32.totalorder %s18, 0
      %p183 = por %p181, %p182
      %p184 = scmp.ne.s32.totalorder %s173, %s176
      %p185 = scmp.eq.s32.totalorder %s23, 7
      %p186 = por %p184, %p185
      %p187 = scmp.ne.s32.totalorder %s176, %s177
      %p188 = scmp.eq.s32.totalorder %s23, 0
      %p189 = por %p187, %p188
      %p190 = scmp.ne.s32.totalorder %s176, %s177
      %p191 = scmp.eq.s32.totalorder %s24, 7
      %p192 = por %p190, %p191
      %p194 = scmp.ne.s32.totalorder %s177, %s193
      %p195 = scmp.eq.s32.totalorder %s24, 0
      %p196 = por %p194, %p195
      %p197 = scmp.le.s32.totalorder 1, %s18
      %p198 = scmp.lt.s32.totalorder %s18, 9
      %p199 = pnand %p197, %p198
      %p200 = pneg %p199
      // Predicated region
      $region9: #{tpu_custom_call.1} parent=5 // pred_check
        _
      $region10: #{tpu_custom_call.1} parent=5 // pred_check_branch
        %202 = sbr.rel (%p199) target = $region12
      $region11: #{tpu_custom_call.1} parent=5 // pred_region
        %s203 = ssub.s32 %s18, 1
        // Predicated region
        $region13: #{tpu_custom_call.1} parent=11 // pred_check
          %p204 = pneg %p84
        $region14: #{tpu_custom_call.1} parent=11 // pred_check_branch
          %206 = sbr.rel (%p204) target = $region16
        $region15: #{tpu_custom_call.1} parent=11 // pred_region
          %208 = vsyncadd [#allocation3], 0
          %s209 = sshll.u32 %s1, 4
          %s210 = int_to_ptr.hbm [resolvable:$true] %s209
          %s211 = sshll.u32 [#allocation2], 4
          %s212 = int_to_ptr.vmem [resolvable:$true] %s211
          %217 = dma.hbm_to_vmem [thread:$0]  %s210, 512, %s212, [#allocation3], 64, 64, 4
        $region16: #{tpu_custom_call.1} parent=11 // pred_fallthru
          _
        // Predicated region
        $region17: #{tpu_custom_call.1} parent=11 // pred_check
          %p218 = pneg %p105
        $region18: #{tpu_custom_call.1} parent=11 // pred_check_branch
          %220 = sbr.rel (%p218) target = $region20
        $region19: #{tpu_custom_call.1} parent=11 // pred_region
          _
        $region20: #{tpu_custom_call.1} parent=11 // pred_fallthru
          _
      $region12: #{tpu_custom_call.1} parent=5 // pred_fallthru
        _
      %p221 = scmp.lt.s32.totalorder %s18, 8
      // Predicated region
      $region21: #{tpu_custom_call.1} parent=5 // pred_check
        %p222 = pneg %p221
      $region22: #{tpu_custom_call.1} parent=5 // pred_check_branch
        %224 = sbr.rel (%p222) target = $region24
      $region23: #{tpu_custom_call.1} parent=5 // pred_region
        // Predicated region
        $region25: #{tpu_custom_call.1} parent=23 // pred_check
          %p225 = pneg %p57
        $region26: #{tpu_custom_call.1} parent=23 // pred_check_branch
          %227 = sbr.rel (%p225) target = $region28
        $region27: #{tpu_custom_call.1} parent=23 // pred_region
          %p228 = scmp.lt.s32.totalorder %s25, 1
          %s229 = scalar_select %p228, %s25, 1
          %s230 = scalar_lea.vmem %s0, %s229
        $region28: #{tpu_custom_call.1} parent=23 // pred_fallthru
          _
        // Predicated region
        $region29: #{tpu_custom_call.1} parent=23 // pred_check
          %p231 = pneg %p127
        $region30: #{tpu_custom_call.1} parent=23 // pred_check_branch
          %233 = sbr.rel (%p231) target = $region32
        $region31: #{tpu_custom_call.1} parent=23 // pred_region
          %s234 = sand.u32 %s18, 1
          %s235 = scalar_lea.sflag [#allocation6], %s234
          %s236 = sand.u32 %s117, 1
          %s237 = smul.addr %s236, 32
          %s238 = scalar_lea.vmem [#allocation5], %s237
          %240 = vsyncadd %s235, 0
          %s241 = smul.addr %s25, 16
          %s242 = sadd.s32 %s27, %s241
          %s243 = smul.addr %s242, 4
          %s244 = scalar_lea.hbm %s3, %s243
          %s245 = sshll.u32 %s244, 4
          %s246 = int_to_ptr.hbm [resolvable:$true] %s245
          %s247 = sshll.u32 %s238, 4
          %s248 = int_to_ptr.vmem [resolvable:$true] %s247
          %253 = dma.hbm_to_vmem [thread:$0]  %s246, 512, %s248, %s235, 128, 64, 4
        $region32: #{tpu_custom_call.1} parent=23 // pred_fallthru
          _
        // Predicated region
        $region33: #{tpu_custom_call.1} parent=23 // pred_check
          %p254 = pneg %p155
        $region34: #{tpu_custom_call.1} parent=23 // pred_check_branch
          %256 = sbr.rel (%p254) target = $region36
        $region35: #{tpu_custom_call.1} parent=23 // pred_region
          %s257 = sand.u32 %s18, 1
          %s258 = scalar_lea.sflag [#allocation6], %s257
          %s259 = sand.u32 %s145, 1
          %s260 = smul.addr %s259, 64
          %s261 = scalar_lea.vmem [#allocation7], %s260
          %s262 = smul.u32 16, %s27
          %264 = vsyncadd %s258, 0
          %s265 = smul.addr %s262, 2
          %s266 = sadd.s32 %s26, %s265
          %s267 = smul.addr %s266, 4
          %s268 = scalar_lea.hbm %s4, %s267
          %s269 = sshll.u32 %s268, 4
          %s270 = int_to_ptr.hbm [resolvable:$true] %s269
          %s271 = sshll.u32 %s261, 4
          %s272 = int_to_ptr.vmem [resolvable:$true] %s271
          %277 = dma.hbm_to_vmem [thread:$0]  %s270, 1024, %s272, %s258, 128, 64, 4
        $region36: #{tpu_custom_call.1} parent=23 // pred_fallthru
          _
      $region24: #{tpu_custom_call.1} parent=5 // pred_fallthru
        _
      %p278 = scmp.le.s32.totalorder 1, %s18
      %p279 = scmp.lt.s32.totalorder %s18, 9
      %p280 = pnand %p278, %p279
      %p281 = pneg %p280
      // Predicated region
      $region37: #{tpu_custom_call.1} parent=5 // pred_check
        _
      $region38: #{tpu_custom_call.1} parent=5 // pred_check_branch
        %283 = sbr.rel (%p280) target = $region40
      $region39: #{tpu_custom_call.1} parent=5 // pred_region
        %s284 = ssub.s32 %s18, 1
        // Predicated region
        $region41: #{tpu_custom_call.1} parent=39 // pred_check
          %p285 = pneg %p84
        $region42: #{tpu_custom_call.1} parent=39 // pred_check_branch
          %287 = sbr.rel (%p285) target = $region44
        $region43: #{tpu_custom_call.1} parent=39 // pred_region
          %289 = dma.done [#allocation3], 512
        $region44: #{tpu_custom_call.1} parent=39 // pred_fallthru
          _
        %s290 = sand.u32 %s23, 1
        %s291 = scalar_lea.sflag [#allocation6], %s290
        %s292 = sand.u32 %s120, 1
        %s293 = smul.addr %s292, 32
        %s294 = scalar_lea.vmem [#allocation5], %s293
        // Predicated region
        $region45: #{tpu_custom_call.1} parent=39 // pred_check
          %p295 = pneg %p133
        $region46: #{tpu_custom_call.1} parent=39 // pred_check_branch
          %297 = sbr.rel (%p295) target = $region48
        $region47: #{tpu_custom_call.1} parent=39 // pred_region
          %299 = dma.done %s291, 512
        $region48: #{tpu_custom_call.1} parent=39 // pred_fallthru
          _
        %s300 = sand.u32 %s23, 1
        %s301 = scalar_lea.sflag [#allocation6], %s300
        %s302 = sand.u32 %s148, 1
        %s303 = smul.addr %s302, 64
        %s304 = scalar_lea.vmem [#allocation7], %s303
        // Predicated region
        $region49: #{tpu_custom_call.1} parent=39 // pred_check
          %p305 = pneg %p161
        $region50: #{tpu_custom_call.1} parent=39 // pred_check_branch
          %307 = sbr.rel (%p305) target = $region52
        $region51: #{tpu_custom_call.1} parent=39 // pred_region
          %309 = dma.done %s301, 1024
        $region52: #{tpu_custom_call.1} parent=39 // pred_fallthru
          _
        %p310 = scmp.lt.s32.totalorder %s28, 1
        %s311 = scalar_select %p310, %s28, 1
        %s312 = scalar_lea.vmem %s0, %s311
        %p313 = pneg %p63
        %p314 = pneg %p60
        %p315 = pneg %p84
        %p316 = pneg %p81
        %p317 = pneg %p105
        %p318 = pneg %p102
        %s319 = sand.u32 %s23, 1
        %s320 = scalar_lea.sflag [#allocation6], %s319
        %s321 = sand.u32 %s120, 1
        %s322 = smul.addr %s321, 32
        %s323 = scalar_lea.vmem [#allocation5], %s322
        %p324 = pneg %p133
        %p325 = pneg %p130
        %s326 = sand.u32 %s23, 1
        %s327 = scalar_lea.sflag [#allocation6], %s326
        %s328 = sand.u32 %s148, 1
        %s329 = smul.addr %s328, 64
        %s330 = scalar_lea.vmem [#allocation7], %s329
        %p331 = pneg %p161
        %p332 = pneg %p158
        %p333 = pneg %p189
        %p334 = pneg %p186
        %s335 = sand.u32 %s176, 1
        %s336 = scalar_lea.sflag [#allocation4], %s335
        %s337 = sand.u32 %s176, 1
        %s338 = smul.addr %s337, 64
        %s339 = scalar_lea.vmem [#allocation8], %s338
        %p340 = scmp.lt.s32.totalorder %s28, 1
        %s341 = scalar_select %p340, %s28, 1
        %s342 = scalar_lea.vmem %s0, %s341
        %s343 = smul.u32 16, %s30
        %p345 = scmp.eq.s32.totalorder %s30, 0
        // Predicated region
        $region53: #{tpu_custom_call.1} parent=39 // pred_check
          %p346 = pneg %p345
        $region54: #{tpu_custom_call.1} parent=39 // pred_check_branch
          %348 = sbr.rel (%p346) target = $region56
        $region55: #{tpu_custom_call.1} parent=39 // pred_region
          %349 = vst [vmem:[%s339] sm:$0xff] 0.0
          %350 = vst [vmem:[%s339 + $0x8] sm:$0xff] 0.0
          %351 = vst [vmem:[%s339 + $0x10] sm:$0xff] 0.0
          %352 = vst [vmem:[%s339 + $0x18] sm:$0xff] 0.0
          %353 = vst [vmem:[%s339 + $0x20] sm:$0xff] 0.0
          %354 = vst [vmem:[%s339 + $0x28] sm:$0xff] 0.0
          %355 = vst [vmem:[%s339 + $0x30] sm:$0xff] 0.0
          %356 = vst [vmem:[%s339 + $0x38] sm:$0xff] 0.0
        $region56: #{tpu_custom_call.1} parent=39 // pred_fallthru
          _
        %v357 = vld [vmem:[%s342] sm:$0x1]
        %s358 = smul.u32 %s30, 4
        %s359 = smul.addr %s358, 4
        %s360 = scalar_lea.vmem [#allocation2], %s359
        %v361 = vld [vmem:[%s360] sm:$0xf]
        %v362 = vld [vmem:[%s360 + $0x4] sm:$0xf]
        %v363 = vld [vmem:[%s360 + $0x8] sm:$0xf]
        %v364 = vld [vmem:[%s360 + $0xc] sm:$0xf]
        %s365 = scalar_lea.vmem %s2, %s30
        %v366 = vld [vmem:[%s365] sm:$0x1]
        %v371 = vunpack.c.l.b16 %v361
        %v372 = vunpack.c.l.b16 %v362
        %v373 = vunpack.c.l.b16 %v363
        %v374 = vunpack.c.l.b16 %v364
        %v375 = vpack.c.b16 %v372, %v371
        %v376 = vpack.c.b16 %v374, %v373
        %vm379 = vcmask 261120
        %v381 = vsel %vm379, %v357, 0
        %383 = vmatpush.bf16.msra.mxu0 0
        %384 = vmatpush.bf16.msra.mxu0 0
        %385 = vmatpush.bf16.msra.mxu0 0
        %386 = vmatpush.bf16.msra.mxu0 0
        %387 = vmatpush.bf16.msra.mxu0 0
        %388 = vmatpush.bf16.msra.mxu0 0
        %389 = vmatpush.bf16.msra.mxu0 %v376
        %390 = vmatpush.bf16.msra.mxu0 %v375
        %391 = vmatmul.bf16.gmra.mxu0 %v381
        %v392 = vpop.f32.mrf.mxu0
        %v393 = vadd.f32 %v366, %v392
        %v394 = vpop.f32.mrf.mxu0
        %395 = vdwg.mxu0
        %v396 = vxor.u32 %v393, 2147483648
        %v397 = vmul.f32 %v396, 1.442695
        %v398 = vpow.pop %v397
        %v399 = vadd.f32 %v398, 1.0
        %v400 = vrcp.pop %v399
        %v401 = vmul.f32 %v399, %v400
        %v402 = vsub.f32 1.0, %v401
        %v403 = vmul.f32 %v400, %v402
        %v404 = vadd.f32 %v400, %v403
        %vm405 = vweird.f32 %v399
        %vm406 = vweird.f32 %v400
        %vm407 = vmor %vm405, %vm406
        %v408 = vsel %vm407, %v400, %v404
        %v409 = vand.u32 2147483647, %v399
        %vm410 = vcmp.eq.f32.partialorder %v409, 8.507059e+37
        %v411 = vand.u32 %v399, 2147483648
        %v412 = vor.u32 1.1754944e-38, %v411
        %v413 = vsel %vm410, %v412, %v408
        %v414 = vmul.f32 1.0, %v413
        %v415 = vpack.c.bf16 %v414, %v414
        %v416 = vld [vmem:[%s294] sm:$0xf]
        %v417 = vld [vmem:[%s294 + $0x4] sm:$0xf]
        %v418 = vld [vmem:[%s294 + $0x8] sm:$0xf]
        %v419 = vld [vmem:[%s294 + $0xc] sm:$0xf]
        %v420 = vld [vmem:[%s294 + $0x10] sm:$0xf]
        %v421 = vld [vmem:[%s294 + $0x14] sm:$0xf]
        %v422 = vld [vmem:[%s294 + $0x18] sm:$0xf]
        %v423 = vld [vmem:[%s294 + $0x1c] sm:$0xf]
        %v425 = vpack.i.b16 %v415, %v415
        %v427 = vperm.slane %v425, 0
        %v428 = vunpack.c.l.bf16 %v416
        %v429 = vunpack.c.l.bf16 %v417
        %v430 = vunpack.c.l.bf16 %v418
        %v431 = vunpack.c.l.bf16 %v419
        %v432 = vunpack.c.l.bf16 %v420
        %v433 = vunpack.c.l.bf16 %v421
        %v434 = vunpack.c.l.bf16 %v422
        %v435 = vunpack.c.l.bf16 %v423
        %v436 = vunpack.c.l.bf16 %v427
        %v437 = vmul.f32 %v428, %v436
        %v438 = vmul.f32 %v429, %v436
        %v439 = vmul.f32 %v430, %v436
        %v440 = vmul.f32 %v431, %v436
        %v441 = vmul.f32 %v432, %v436
        %v442 = vmul.f32 %v433, %v436
        %v443 = vmul.f32 %v434, %v436
        %v444 = vmul.f32 %v435, %v436
        %v445 = vpack.c.bf16 %v438, %v437
        %v446 = vpack.c.bf16 %v440, %v439
        %v447 = vpack.c.bf16 %v442, %v441
        %v448 = vpack.c.bf16 %v444, %v443
        %v449 = vld [vmem:[%s339] sm:$0xff]
        %v450 = vld [vmem:[%s339 + $0x8] sm:$0xff]
        %v451 = vld [vmem:[%s339 + $0x10] sm:$0xff]
        %v452 = vld [vmem:[%s339 + $0x18] sm:$0xff]
        %v453 = vld [vmem:[%s339 + $0x20] sm:$0xff]
        %v454 = vld [vmem:[%s339 + $0x28] sm:$0xff]
        %v455 = vld [vmem:[%s339 + $0x30] sm:$0xff]
        %v456 = vld [vmem:[%s339 + $0x38] sm:$0xff]
        %v457 = vld [vmem:[%s304] sm:$0xf]
        %v458 = vld [vmem:[%s304 + $0x4] sm:$0xf]
        %v459 = vld [vmem:[%s304 + $0x8] sm:$0xf]
        %v460 = vld [vmem:[%s304 + $0xc] sm:$0xf]
        %v461 = vld [vmem:[%s304 + $0x10] sm:$0xf]
        %v462 = vld [vmem:[%s304 + $0x14] sm:$0xf]
        %v463 = vld [vmem:[%s304 + $0x18] sm:$0xf]
        %v464 = vld [vmem:[%s304 + $0x1c] sm:$0xf]
        %v465 = vld [vmem:[%s304 + $0x20] sm:$0xf]
        %v466 = vld [vmem:[%s304 + $0x24] sm:$0xf]
        %v467 = vld [vmem:[%s304 + $0x28] sm:$0xf]
        %v468 = vld [vmem:[%s304 + $0x2c] sm:$0xf]
        %v469 = vld [vmem:[%s304 + $0x30] sm:$0xf]
        %v470 = vld [vmem:[%s304 + $0x34] sm:$0xf]
        %v471 = vld [vmem:[%s304 + $0x38] sm:$0xf]
        %v472 = vld [vmem:[%s304 + $0x3c] sm:$0xf]
        %v489 = vunpack.c.l.b16 %v457
        %v490 = vunpack.c.l.b16 %v458
        %v491 = vunpack.c.l.b16 %v459
        %v492 = vunpack.c.l.b16 %v460
        %v493 = vunpack.c.l.b16 %v461
        %v494 = vunpack.c.l.b16 %v462
        %v495 = vunpack.c.l.b16 %v463
        %v496 = vunpack.c.l.b16 %v464
        %v497 = vunpack.c.l.b16 %v465
        %v498 = vunpack.c.l.b16 %v466
        %v499 = vunpack.c.l.b16 %v467
        %v500 = vunpack.c.l.b16 %v468
        %v501 = vunpack.c.l.b16 %v469
        %v502 = vunpack.c.l.b16 %v470
        %v503 = vunpack.c.l.b16 %v471
        %v504 = vunpack.c.l.b16 %v472
        %v505 = vpack.c.b16 %v490, %v489
        %v506 = vpack.c.b16 %v492, %v491
        %v507 = vpack.c.b16 %v494, %v493
        %v508 = vpack.c.b16 %v496, %v495
        %v509 = vpack.c.b16 %v498, %v497
        %v510 = vpack.c.b16 %v500, %v499
        %v511 = vpack.c.b16 %v502, %v501
        %v512 = vpack.c.b16 %v504, %v503
        %521 = vmatpush.bf16.msra.mxu0 %v512
        %522 = vmatpush.bf16.msra.mxu0 %v511
        %523 = vmatpush.bf16.msra.mxu0 %v510
        %524 = vmatpush.bf16.msra.mxu0 %v509
        %525 = vmatpush.bf16.msra.mxu0 %v508
        %526 = vmatpush.bf16.msra.mxu0 %v507
        %527 = vmatpush.bf16.msra.mxu0 %v506
        %528 = vmatpush.bf16.msra.mxu0 %v505
        %529 = vmatmul.bf16.gmra.mxu0 %v445
        %v530 = vpop.f32.mrf.mxu0
        %v531 = vadd.f32 0.0, %v530
        %v532 = vpop.f32.mrf.mxu0
        %v533 = vadd.f32 0.0, %v532
        %534 = vmatmul.bf16.gmra.mxu0 %v446
        %v535 = vpop.f32.mrf.mxu0
        %v536 = vadd.f32 0.0, %v535
        %v537 = vpop.f32.mrf.mxu0
        %v538 = vadd.f32 0.0, %v537
        %539 = vmatmul.bf16.gmra.mxu0 %v447
        %v540 = vpop.f32.mrf.mxu0
        %v541 = vadd.f32 0.0, %v540
        %v542 = vpop.f32.mrf.mxu0
        %v543 = vadd.f32 0.0, %v542
        %544 = vmatmul.bf16.gmra.mxu0 %v448
        %v545 = vpop.f32.mrf.mxu0
        %v546 = vadd.f32 0.0, %v545
        %v547 = vpop.f32.mrf.mxu0
        %v548 = vadd.f32 0.0, %v547
        %549 = vdwg.mxu0
        %v550 = vadd.f32 %v449, %v531
        %v551 = vadd.f32 %v450, %v533
        %v552 = vadd.f32 %v451, %v536
        %v553 = vadd.f32 %v452, %v538
        %v554 = vadd.f32 %v453, %v541
        %v555 = vadd.f32 %v454, %v543
        %v556 = vadd.f32 %v455, %v546
        %v557 = vadd.f32 %v456, %v548
        %558 = vst [vmem:[%s339] sm:$0xff] %v550
        %559 = vst [vmem:[%s339 + $0x8] sm:$0xff] %v551
        %560 = vst [vmem:[%s339 + $0x10] sm:$0xff] %v552
        %561 = vst [vmem:[%s339 + $0x18] sm:$0xff] %v553
        %562 = vst [vmem:[%s339 + $0x20] sm:$0xff] %v554
        %563 = vst [vmem:[%s339 + $0x28] sm:$0xff] %v555
        %564 = vst [vmem:[%s339 + $0x30] sm:$0xff] %v556
        %565 = vst [vmem:[%s339 + $0x38] sm:$0xff] %v557
        %s566 = sand.u32 %s176, 1
        %s567 = scalar_lea.sflag [#allocation4], %s566
        %s568 = sand.u32 %s176, 1
        %s569 = smul.addr %s568, 64
        %s570 = scalar_lea.vmem [#allocation8], %s569
        // Predicated region
        $region57: #{tpu_custom_call.1} parent=39 // pred_check
          %p571 = pneg %p186
        $region58: #{tpu_custom_call.1} parent=39 // pred_check_branch
          %573 = sbr.rel (%p571) target = $region60
        $region59: #{tpu_custom_call.1} parent=39 // pred_region
          %575 = vsyncadd %s567, 0
          %s576 = smul.addr %s28, 16
          %s577 = sadd.s32 %s29, %s576
          %s578 = smul.addr %s577, 8
          %s579 = scalar_lea.hbm %s5, %s578
          %s580 = sshll.u32 %s570, 4
          %s581 = int_to_ptr.vmem [resolvable:$true] %s580
          %s582 = sshll.u32 %s579, 4
          %s583 = int_to_ptr.hbm [resolvable:$true] %s582
          %588 = dma.vmem_to_hbm [thread:$0]  %s581, 1024, %s583, %s567, 128, 256, 8
        $region60: #{tpu_custom_call.1} parent=39 // pred_fallthru
          _
      $region40: #{tpu_custom_call.1} parent=5 // pred_fallthru
        _
      %p589 = scmp.le.s32.totalorder 2, %s18
      // Predicated region
      $region61: #{tpu_custom_call.1} parent=5 // pred_check
        %p590 = pneg %p589
      $region62: #{tpu_custom_call.1} parent=5 // pred_check_branch
        %592 = sbr.rel (%p590) target = $region64
      $region63: #{tpu_custom_call.1} parent=5 // pred_region
        %s593 = ssub.s32 %s18, 2
        // Predicated region
        $region65: #{tpu_custom_call.1} parent=63 // pred_check
          %p594 = pneg %p192
        $region66: #{tpu_custom_call.1} parent=63 // pred_check_branch
          %596 = sbr.rel (%p594) target = $region68
        $region67: #{tpu_custom_call.1} parent=63 // pred_region
          %s597 = sand.u32 %s177, 1
          %s598 = scalar_lea.sflag [#allocation4], %s597
          %s599 = sand.u32 %s177, 1
          %s600 = smul.addr %s599, 64
          %s601 = scalar_lea.vmem [#allocation8], %s600
          %603 = dma.done %s598, 1024
        $region68: #{tpu_custom_call.1} parent=63 // pred_fallthru
          _
      $region64: #{tpu_custom_call.1} parent=5 // pred_fallthru
        _
    $region6: #{tpu_custom_call.1} parent=1 // loop_footer
      %s22 = sadd.s32 1, %s18
    $region7: #{tpu_custom_call.1} parent=1 // loop_footer_branch
      %17 = sbr.rel target = $region3
    $region8: #{tpu_custom_call.1} parent=1 // loop_exit
      _
    %604 = vsyncpa [#allocation3], 1
    %s605 = scalar_lea.sflag [#allocation3], 1
    %606 = vsyncpa %s605, 1
    %607 = vsyncpa [#allocation6], 1
    %s608 = scalar_lea.sflag [#allocation6], 1
    %609 = vsyncpa %s608, 1
    %610 = vsyncpa [#allocation4], 1
    %s611 = scalar_lea.sflag [#allocation4], 1
    %612 = vsyncpa %s611, 1

</llo_original>
